<compile_context>
chip_gen: v5e
topology: v5e:2x2
jax: 0.10.0
libtpu: 0.0.40
codegen_flags: <defaults>
</compile_context>

<pallas_src>
import functools

import jax
import jax.numpy as jnp
from jax import lax
from jax.experimental import pallas as pl
from jax.experimental.pallas import tpu as pltpu


def _self_attention_kernel(gamma_ref,   # SMEM (1,) f32
                           x_ref,       # (1, C, Np) f32   (all keys, per batch)
                           w_ref,       # (P, C)  bf16     fused [Wq_pad; Wk_pad; Wv]
                           b_ref,       # (P, 1)  f32      fused [bq_pad; 0;      bv]
                           o_ref,       # (1, C, tq) f32   (this query tile)
                           *, c, cqp, tq, n_valid, n_padded):
    qi = pl.program_id(1)
    q_start = pl.multiple_of(qi * tq, tq)

    x = x_ref[0]                                      # (C, Np) f32
    xb = x.astype(jnp.bfloat16)

    # ---- key / value projection over ALL keys: one fused bf16 MXU matmul ---
    # kv[p, n] = sum_c Wkv[p, c] * x[c, n] + bkv[p]   (bk dropped: cancels)
    kv = lax.dot_general(
        w_ref[cqp:, :], xb,
        dimension_numbers=(((1,), (0,)), ((), ())),
        preferred_element_type=jnp.float32,
    ) + b_ref[cqp:, :]                                # (cqp + C, Np) f32
    k = kv[0:cqp, :].astype(jnp.bfloat16)             # (cqp, Np)  (pad rows == 0)
    v = kv[cqp:cqp + c, :].astype(jnp.bfloat16)       # (C,   Np)

    # ---- query projection for this query tile only --------------------------
    x_tile = x_ref[0, :, pl.ds(q_start, tq)]          # (C, tq) f32
    q = lax.dot_general(
        w_ref[0:cqp, :], x_tile.astype(jnp.bfloat16),
        dimension_numbers=(((1,), (0,)), ((), ())),
        preferred_element_type=jnp.float32,
    ) + b_ref[0:cqp, :]                               # (cqp, tq) f32
    qb = q.astype(jnp.bfloat16)

    # ---- energy, transposed orientation (keys j on sublanes) ---------------
    # energy_t[j, i] = sum_p k[p, j] * q[p, i]        bf16 operands, f32 accum
    energy_t = lax.dot_general(
        k, qb,
        dimension_numbers=(((0,), (0,)), ((), ())),
        preferred_element_type=jnp.float32,
    )                                                 # (Np, tq) f32

    if n_valid < n_padded:
        # Mask padded key rows so they get zero attention weight (exact).
        key_idx = lax.broadcasted_iota(jnp.int32, (n_padded, tq), 0)
        energy_t = jnp.where(key_idx < n_valid, energy_t, jnp.float32(-1e30))

    # ---- softmax over keys (axis 0); fuse scale + bf16 cast into one pass --
    m = jnp.max(energy_t, axis=0, keepdims=True)      # (1, tq)
    e = jnp.exp(energy_t - m)                         # (Np, tq)
    inv_s = pl.reciprocal(jnp.sum(e, axis=0, keepdims=True), approx=True)
    att = (e * inv_s).astype(jnp.bfloat16)            # (Np, tq) bf16, no f32 att kept

    # ---- out[ci, i] = sum_j v[ci, j] * att[j, i]   (native MXU orientation) -
    out = lax.dot_general(
        v, att,
        dimension_numbers=(((1,), (0,)), ((), ())),
        preferred_element_type=jnp.float32,
    )                                                 # (C, tq) f32

    o_ref[0] = (gamma_ref[0] * out + x_tile).astype(o_ref.dtype)


def _fuse_params(params, c):
    """Concatenate Wq|Wk|Wv (Cq zero-padded to a multiple of 8 sublanes).

    Dropping the key bias is exact: in energy_ij = (Wq x_i + bq).(Wk x_j + bk)
    the bk-dependent term is constant over j and cancels in the row softmax.
    """
    cq = params["wq"].shape[0]
    cqp = max(8, ((cq + 7) // 8) * 8)
    zw = jnp.zeros((cqp - cq, c), jnp.float32)
    zb = jnp.zeros((cqp - cq,), jnp.float32)
    w_fused = jnp.concatenate(
        [params["wq"], zw, params["wk"], zw, params["wv"]], axis=0
    ).astype(jnp.bfloat16)                            # (2*cqp + C, C)
    b_fused = jnp.concatenate(
        [params["bq"], zb, jnp.zeros((cqp,), jnp.float32), params["bv"]], axis=0
    )[:, None]                                        # (2*cqp + C, 1)
    return w_fused, b_fused, cqp


def self_attention_pallas(x_nchw, params, *, tq_target=256):
    """x_nchw: (B, C, H, W) float32. Returns (B, C, H, W)."""
    B, C, H, W = x_nchw.shape
    N = H * W
    Np = ((N + 127) // 128) * 128                     # lane-align spatial dim

    # NCHW is already channel-major: (B, C, N) — reshape only, no transpose.
    x_cn = x_nchw.reshape(B, C, N)
    if Np != N:
        x_cn = jnp.pad(x_cn, ((0, 0), (0, 0), (0, Np - N)))

    # Query-tile size: multiple of 128 that divides the padded spatial extent.
    tq = min(tq_target, Np)
    while Np % tq != 0:
        tq -= 128
    ntiles = Np // tq

    w_fused, b_fused, cqp = _fuse_params(params, C)
    P = 2 * cqp + C

    kernel = functools.partial(_self_attention_kernel, c=C, cqp=cqp, tq=tq,
                               n_valid=N, n_padded=Np)

    grid_spec = pltpu.PrefetchScalarGridSpec(
        num_scalar_prefetch=0,
        grid=(B, ntiles),
        in_specs=[
            pl.BlockSpec(memory_space=pltpu.SMEM),               # gamma (1,)
            pl.BlockSpec((1, C, Np), lambda b, qi: (b, 0, 0)),   # x (all keys)
            pl.BlockSpec((P, C), lambda b, qi: (0, 0)),          # fused weights
            pl.BlockSpec((P, 1), lambda b, qi: (0, 0)),          # fused bias
        ],
        out_specs=pl.BlockSpec((1, C, tq), lambda b, qi: (b, 0, qi)),
    )

    flops = B * ntiles * (2 * (cqp + C) * C * Np      # k/v projection (per tile)
                          + 2 * cqp * C * tq          # q projection
                          + 2 * cqp * Np * tq         # energy
                          + 2 * C * Np * tq)          # att @ v
    cost = pl.CostEstimate(
        flops=int(flops),
        transcendentals=int(B * Np * Np),
        bytes_accessed=int(2 * B * C * Np * 4 + P * C * 2 + P * 4),
    )

    out_cn = pl.pallas_call(
        kernel,
        out_shape=jax.ShapeDtypeStruct((B, C, Np), x_nchw.dtype),
        grid_spec=grid_spec,
        compiler_params=pltpu.CompilerParams(
            dimension_semantics=("parallel", "parallel"),
            vmem_limit_bytes=48 * 1024 * 1024,
        ),
        cost_estimate=cost,
    )(params["gamma"], x_cn, w_fused, b_fused)

    return out_cn[:, :, :N].reshape(B, C, H, W)


def init_params(key, in_channels):
    """Synthetic init matching nn.Conv2d(k=1) parameter shapes (weights squeezed)."""
    cq = in_channels // 8
    k = jax.random.split(key, 6)
    scale = 1.0 / jnp.sqrt(in_channels)
    return {
        "wq": jax.random.normal(k[0], (cq, in_channels), jnp.float32) * scale,
        "bq": jax.random.normal(k[1], (cq,), jnp.float32) * scale,
        "wk": jax.random.normal(k[2], (cq, in_channels), jnp.float32) * scale,
        "bk": jax.random.normal(k[3], (cq,), jnp.float32) * scale,
        "wv": jax.random.normal(k[4], (in_channels, in_channels), jnp.float32) * scale,
        "bv": jax.random.normal(k[5], (in_channels,), jnp.float32) * scale,
        # nn.Parameter(torch.zeros(1)) -> gamma=0 would make the attention path
        # a no-op; use a nonzero value so the kernel path is exercised.
        "gamma": jnp.array([0.5], dtype=jnp.float32),
    }


def self_attention_ref(x_nchw, params):
    """Pure-JAX f32 reference mirroring the PyTorch forward exactly (incl. bk)."""
    B, C, H, W = x_nchw.shape
    N = H * W
    x = x_nchw.reshape(B, C, N)
    q = jnp.einsum("oc,bcn->bon", params["wq"], x) + params["bq"][None, :, None]
    k = jnp.einsum("oc,bcn->bon", params["wk"], x) + params["bk"][None, :, None]
    v = jnp.einsum("oc,bcn->bon", params["wv"], x) + params["bv"][None, :, None]
    energy = jnp.einsum("bci,bcj->bij", q, k)         # (B, N, N)
    att = jax.nn.softmax(energy, axis=-1)
    out = jnp.einsum("bcj,bij->bci", v, att)          # (B, C, N)
    res = params["gamma"][0] * out + x
    return res.reshape(B, C, H, W)


if __name__ == "__main__":
    # in_channels=32 -> query/key channels = 32 // 8 = 4; N = 16*16 = 256 lanes.
    B, C, H, W = 2, 32, 16, 16
    key = jax.random.PRNGKey(0)
    kx, kp = jax.random.split(key)
    x = jax.random.normal(kx, (B, C, H, W), jnp.float32)
    params = init_params(kp, C)

    # tq_target=128 -> grid (2, 2): exercises the query-tiled path.
    out = jax.block_until_ready(self_attention_pallas(x, params, tq_target=128))
    ref = self_attention_ref(x, params)
    assert out.shape == (B, C, H, W)
    err = float(jnp.max(jnp.abs(out - ref)))
    # bf16 MXU operands (f32 accumulation) -> tolerance loosened vs pure-f32.
    assert jnp.allclose(out, ref, atol=1e-1, rtol=1e-1), f"max abs err {err}"

    # Non-128-aligned spatial size (14x14 -> N=196): pad-to-256 + key masking.
    x2 = jax.random.normal(kx, (B, C, 14, 14), jnp.float32)
    out2 = jax.block_until_ready(self_attention_pallas(x2, params))
    ref2 = self_attention_ref(x2, params)
    err2 = float(jnp.max(jnp.abs(out2 - ref2)))
    assert jnp.allclose(out2, ref2, atol=1e-1, rtol=1e-1), f"max abs err {err2}"

    print("KERNEL_OK")
</pallas_src>

<mosaic_0001>
module attributes {stable_mosaic.version = 11 : i64} {
  func.func @_self_attention_kernel(%arg0: i32, %arg1: i32, %arg2: memref<1xf32, #tpu.memory_space<smem>>, %arg3: memref<1x32x256xf32, #tpu.memory_space<vmem>>, %arg4: memref<48x32xbf16, #tpu.memory_space<vmem>>, %arg5: memref<48x1xf32, #tpu.memory_space<vmem>>, %arg6: memref<1x32x128xf32, #tpu.memory_space<vmem>>) attributes {dimension_semantics = [#tpu.dimension_semantics<parallel>, #tpu.dimension_semantics<parallel>], iteration_bounds = array<i64: 2, 2>, scalar_prefetch = 0 : i64, scratch_operands = 0 : i64, tpu.core_type = #tpu.core_type<tc>, window_params = [{transform_indices = @transform_0, window_bounds = array<i64: 1>}, {transform_indices = @transform_1, window_bounds = array<i64: 1, 32, 256>}, {pipeline_mode = #tpu.pipeline_mode<synchronous>, transform_indices = @transform_2, window_bounds = array<i64: 48, 32>}, {pipeline_mode = #tpu.pipeline_mode<synchronous>, transform_indices = @transform_3, window_bounds = array<i64: 48, 1>}, {transform_indices = @transform_4, window_bounds = array<i64: 1, 32, 128>}]} {
    %c128_i32 = arith.constant 128 : i32
    %0 = arith.muli %arg1, %c128_i32 : i32
    %1 = tpu.assume_multiple %0, 128 : i32
    %c0 = arith.constant 0 : index
    %c0_0 = arith.constant 0 : index
    %c0_1 = arith.constant 0 : index
    %2 = vector.load %arg3[%c0, %c0_0, %c0_1] : memref<1x32x256xf32, #tpu.memory_space<vmem>>, vector<1x32x256xf32>
    %3 = vector.shape_cast %2 : vector<1x32x256xf32> to vector<32x256xf32>
    %4 = arith.truncf %3 : vector<32x256xf32> to vector<32x256xbf16>
    %c8 = arith.constant 8 : index
    %c0_2 = arith.constant 0 : index
    %5 = vector.load %arg4[%c8, %c0_2] : memref<48x32xbf16, #tpu.memory_space<vmem>>, vector<40x32xbf16>
    %cst = arith.constant dense<0.000000e+00> : vector<40x256xf32>
    %6 = tpu.matmul %5, %4, %cst {dimension_numbers = #tpu.dot_dimension_numbers<[1], [0], [0], [1], [0, 0, 1, 1], [], []>} : vector<40x32xbf16>, vector<32x256xbf16>, vector<40x256xf32> -> vector<40x256xf32>
    %c8_3 = arith.constant 8 : index
    %c0_4 = arith.constant 0 : index
    %7 = vector.load %arg5[%c8_3, %c0_4] : memref<48x1xf32, #tpu.memory_space<vmem>>, vector<40x1xf32>
    %8 = vector.broadcast %7 : vector<40x1xf32> to vector<40x256xf32>
    %9 = arith.addf %6, %8 : vector<40x256xf32>
    %10 = vector.extract_strided_slice %9 {offsets = [0, 0], sizes = [8, 256], strides = [1, 1]} : vector<40x256xf32> to vector<8x256xf32>
    %11 = arith.truncf %10 : vector<8x256xf32> to vector<8x256xbf16>
    %12 = vector.extract_strided_slice %9 {offsets = [8, 0], sizes = [32, 256], strides = [1, 1]} : vector<40x256xf32> to vector<32x256xf32>
    %13 = arith.truncf %12 : vector<32x256xf32> to vector<32x256xbf16>
    %c0_5 = arith.constant 0 : index
    %c0_6 = arith.constant 0 : index
    %14 = arith.index_cast %1 : i32 to index
    %15 = vector.load %arg3[%c0_5, %c0_6, %14] : memref<1x32x256xf32, #tpu.memory_space<vmem>>, vector<1x32x128xf32>
    %16 = vector.shape_cast %15 : vector<1x32x128xf32> to vector<32x128xf32>
    %c0_7 = arith.constant 0 : index
    %c0_8 = arith.constant 0 : index
    %17 = vector.load %arg4[%c0_7, %c0_8] : memref<48x32xbf16, #tpu.memory_space<vmem>>, vector<8x32xbf16>
    %18 = arith.truncf %16 : vector<32x128xf32> to vector<32x128xbf16>
    %cst_9 = arith.constant dense<0.000000e+00> : vector<8x128xf32>
    %19 = tpu.matmul %17, %18, %cst_9 {dimension_numbers = #tpu.dot_dimension_numbers<[1], [0], [0], [1], [0, 0, 1, 1], [], []>} : vector<8x32xbf16>, vector<32x128xbf16>, vector<8x128xf32> -> vector<8x128xf32>
    %c0_10 = arith.constant 0 : index
    %c0_11 = arith.constant 0 : index
    %20 = vector.load %arg5[%c0_10, %c0_11] : memref<48x1xf32, #tpu.memory_space<vmem>>, vector<8x1xf32>
    %21 = vector.broadcast %20 : vector<8x1xf32> to vector<8x128xf32>
    %22 = arith.addf %19, %21 : vector<8x128xf32>
    %23 = arith.truncf %22 : vector<8x128xf32> to vector<8x128xbf16>
    %cst_12 = arith.constant dense<0.000000e+00> : vector<256x128xf32>
    %24 = tpu.matmul %11, %23, %cst_12 {dimension_numbers = #tpu.dot_dimension_numbers<[0], [0], [1], [1], [0, 1, 1, 1], [], []>} : vector<8x256xbf16>, vector<8x128xbf16>, vector<256x128xf32> -> vector<256x128xf32>
    %cst_13 = arith.constant dense<0xFF800000> : vector<128xf32>
    %25 = vector.multi_reduction <maximumf>, %24, %cst_13 [0] : vector<256x128xf32> to vector<128xf32>
    %26 = vector.shape_cast %25 : vector<128xf32> to vector<1x128xf32>
    %27 = vector.broadcast %26 : vector<1x128xf32> to vector<256x128xf32>
    %28 = arith.subf %24, %27 : vector<256x128xf32>
    %29 = math.exp %28 : vector<256x128xf32>
    %cst_14 = arith.constant dense<0.000000e+00> : vector<128xf32>
    %30 = vector.multi_reduction <add>, %29, %cst_14 [0] : vector<256x128xf32> to vector<128xf32>
    %31 = vector.shape_cast %30 : vector<128xf32> to vector<1x128xf32>
    %32 = tpu.reciprocal %31 {approx = true} : vector<1x128xf32> -> vector<1x128xf32>
    %33 = vector.broadcast %32 : vector<1x128xf32> to vector<256x128xf32>
    %34 = arith.mulf %29, %33 : vector<256x128xf32>
    %35 = arith.truncf %34 : vector<256x128xf32> to vector<256x128xbf16>
    %cst_15 = arith.constant dense<0.000000e+00> : vector<32x128xf32>
    %36 = tpu.matmul %13, %35, %cst_15 {dimension_numbers = #tpu.dot_dimension_numbers<[1], [0], [0], [1], [0, 0, 1, 1], [], []>} : vector<32x256xbf16>, vector<256x128xbf16>, vector<32x128xf32> -> vector<32x128xf32>
    %c0_16 = arith.constant 0 : index
    %37 = memref.load %arg2[%c0_16] : memref<1xf32, #tpu.memory_space<smem>>
    %38 = vector.broadcast %37 : f32 to vector<32x128xf32>
    %39 = arith.mulf %38, %36 : vector<32x128xf32>
    %40 = arith.addf %39, %16 : vector<32x128xf32>
    %c0_17 = arith.constant 0 : index
    %c0_18 = arith.constant 0 : index
    %c0_19 = arith.constant 0 : index
    %41 = vector.load %arg6[%c0_17, %c0_18, %c0_19] : memref<1x32x128xf32, #tpu.memory_space<vmem>>, vector<1x32x128xf32>
    %42 = vector.shape_cast %41 : vector<1x32x128xf32> to vector<32x128xf32>
    %43 = vector.shape_cast %40 : vector<32x128xf32> to vector<1x32x128xf32>
    tpu.vector_store %arg6[%c0_17, %c0_18, %c0_19], %43 {strides = array<i32>} : memref<1x32x128xf32, #tpu.memory_space<vmem>>, vector<1x32x128xf32>,
    return
  }
  func.func @transform_0(%arg0: i32, %arg1: i32) -> i32 {
    %c0_i32 = arith.constant 0 : i32
    %c0_i32_0 = arith.constant 0 : i32
    return %c0_i32 : i32
  }
  func.func @transform_1(%arg0: i32, %arg1: i32) -> (i32, i32, i32) {
    %c0_i32 = arith.constant 0 : i32
    %c0_i32_0 = arith.constant 0 : i32
    %c0_i32_1 = arith.constant 0 : i32
    return %arg0, %c0_i32, %c0_i32_0 : i32, i32, i32
  }
  func.func @transform_2(%arg0: i32, %arg1: i32) -> (i32, i32) {
    %c0_i32 = arith.constant 0 : i32
    %c0_i32_0 = arith.constant 0 : i32
    %c0_i32_1 = arith.constant 0 : i32
    return %c0_i32, %c0_i32_0 : i32, i32
  }
  func.func @transform_3(%arg0: i32, %arg1: i32) -> (i32, i32) {
    %c0_i32 = arith.constant 0 : i32
    %c0_i32_0 = arith.constant 0 : i32
    %c0_i32_1 = arith.constant 0 : i32
    return %c0_i32, %c0_i32_0 : i32, i32
  }
  func.func @transform_4(%arg0: i32, %arg1: i32) -> (i32, i32, i32) {
    %c0_i32 = arith.constant 0 : i32
    %c0_i32_0 = arith.constant 0 : i32
    return %arg0, %c0_i32, %arg1 : i32, i32, i32
  }
}

</mosaic_0001>

<llo_original>
// kernel: tpu_custom_call.1
$region0: #{tpu_custom_call.1}
  #allocation0 [shape = 'u32[]', space=smem, size = 0x4, offset = 0x4, fixed_abs, tag = 'smem constant byte address 0x4 - core index']
  #allocation1 [shape = 'u32[72,128]{1,0:T(1,128)}', space=vmem, size = 0x9000, scoped, tag = 'internal scratch']
  #allocation2 [shape = 'f32[1]{0:T(128)S(6)}', space=smem, size = 0x200, scoped, tag = 'scoped memory for tpu_custom_call.1']
  %s0 = inlined_call_operand.<no memory space> [shape: f32[1], index: 0, kind: input, shape index: {}]
  %s1 = inlined_call_operand.hbm [shape: f32[2,32,256], index: 1, kind: input, shape index: {}]
  %s2 = inlined_call_operand.vmem [shape: bf16[48,32], index: 2, kind: input, shape index: {}]
  %s3 = inlined_call_operand.vmem [shape: f32[48,1], index: 3, kind: input, shape index: {}]
  %s4 = inlined_call_operand.hbm [shape: f32[2,32,256], index: 4, kind: output, shape index: {}]
  %s5 = sld [smem:[#allocation0]]
  $region53: #{tpu_custom_call.1} parent=0
    _
  %s7 = ssub.s32 1, %s5
  %s8 = scalar_select 0, %s7, %s5
  %9 = sst [smem:[#allocation2]] %s0
  $region1: #{tpu_custom_call.1} parent=0
    #allocation3 [shape = 'u8[65536]{0}', space=vmem, size = 0x10000, scoped, tag = 'input window, operand 1']
    #allocation4 [shape = 's32[2]{0}', space=sflag, size = 0x8, scoped, tag = 'scoped memory for tpu_custom_call.1']
    #allocation5 [shape = 's32[2]{0}', space=sflag, size = 0x8, scoped, tag = 'scoped memory for tpu_custom_call.1']
    #allocation6 [shape = 'u8[32768]{0}', space=vmem, size = 0x8000, scoped, tag = 'output window, operand 0']
    %10 = vsyncpa [#allocation4], 0
    %s11 = scalar_lea.sflag [#allocation4], 1
    %12 = vsyncpa %s11, 0
    %13 = vsyncpa [#allocation5], 0
    %s14 = scalar_lea.sflag [#allocation5], 1
    %15 = vsyncpa %s14, 0
    loop: start=0, step=1, limit=6
    $region2: #{tpu_custom_call.1} parent=1 // loop_pre_header
      _
    $region3: #{tpu_custom_call.1} parent=1 // loop_header
      %s17 = sphi 0, %s21
      %p18 = scmp.ge.s32.totalorder %s17, 6
      %s24 = sphi 0, %s36
      %s25 = sphi 0, %s32
      %s26 = sphi 0, %s24
      %s27 = sphi 0, %s25
      %s28 = sphi 0, %s26
      %s29 = sphi 0, %s27
      %s37 = sphi 0, %s37
      %s39 = sphi 0, %s37
      %s40 = sphi 0, %s39
      %s54 = sphi 0, %s40
      %s60 = sphi 0, %s62
      %s63 = sphi 0, %s60
      %s64 = sphi 0, %s63
      %s80 = sphi 0, %s64
      %s84 = sphi 0, %s84
      %s86 = sphi 0, %s84
      %s87 = sphi 0, %s86
      %s101 = sphi 0, %s87
      %s105 = sphi 0, %s105
      %s107 = sphi 0, %s105
      %s108 = sphi 0, %s107
      %s122 = sphi 0, %s108
      %s130 = sphi 0, %s132
      %s133 = sphi 0, %s130
      %s134 = sphi 0, %s133
      %s150 = sphi 0, %s134
    $region4: #{tpu_custom_call.1} parent=1 // loop_header_branch
      %20 = sbr.rel (%p18) target = $region8
    $region5: #{tpu_custom_call.1} parent=1 // loop_body
      %s22 = ssub.s32 %s17, 1
      %s23 = ssub.s32 %s17, 2
      %s30 = sadd.s32 1, %s25
      %p31 = scmp.ge.s32.totalorder %s30, 2
      %s32 = scalar_select %p31, 0, %s30
      %s33 = sadd.s32 1, %s24
      %s34 = scalar_select %p31, %s33, %s24
      %p35 = scmp.ge.s32.totalorder %s34, 2
      %s36 = scalar_select %p35, 0, %s34
      %s38 = sadd.s32 %s37, 1
      %p41 = scmp.eq.s32.totalorder %s17, 3
      %p42 = scmp.ne.s32.totalorder %s37, %s39
      %p43 = scmp.eq.s32.totalorder %s17, 0
      %p44 = por %p42, %p43
      %p45 = scmp.ne.s32.totalorder %s37, %s39
      %p46 = scmp.eq.s32.totalorder %s22, 3
      %p47 = por %p45, %p46
      %p48 = scmp.ne.s32.totalorder %s39, %s40
      %p49 = scmp.eq.s32.totalorder %s22, 0
      %p50 = por %p48, %p49
      %p51 = scmp.ne.s32.totalorder %s39, %s40
      %p52 = scmp.eq.s32.totalorder %s23, 3
      %p53 = por %p51, %p52
      %p55 = scmp.ne.s32.totalorder %s40, %s54
      %p56 = scmp.eq.s32.totalorder %s23, 0
      %p57 = por %p55, %p56
      %s58 = ssub.s32 %s24, %s36
      %p59 = scmp.eq.s32.totalorder %s58, 0
      %s61 = sadd.s32 %s60, 1
      %s62 = scalar_select %p59, %s60, %s61
      %p65 = pneg %p59
      %p66 = scmp.eq.s32.totalorder %s17, 3
      %p67 = por %p65, %p66
      %p68 = scmp.ne.s32.totalorder %s60, %s63
      %p69 = scmp.eq.s32.totalorder %s17, 0
      %p70 = por %p68, %p69
      %p71 = scmp.ne.s32.totalorder %s60, %s63
      %p72 = scmp.eq.s32.totalorder %s22, 3
      %p73 = por %p71, %p72
      %p74 = scmp.ne.s32.totalorder %s63, %s64
      %p75 = scmp.eq.s32.totalorder %s22, 0
      %p76 = por %p74, %p75
      %p77 = scmp.ne.s32.totalorder %s63, %s64
      %p78 = scmp.eq.s32.totalorder %s23, 3
      %p79 = por %p77, %p78
      %p81 = scmp.ne.s32.totalorder %s64, %s80
      %p82 = scmp.eq.s32.totalorder %s23, 0
      %p83 = por %p81, %p82
      %s85 = sadd.s32 %s84, 1
      %p88 = scmp.eq.s32.totalorder %s17, 3
      %p89 = scmp.ne.s32.totalorder %s84, %s86
      %p90 = scmp.eq.s32.totalorder %s17, 0
      %p91 = por %p89, %p90
      %p92 = scmp.ne.s32.totalorder %s84, %s86
      %p93 = scmp.eq.s32.totalorder %s22, 3
      %p94 = por %p92, %p93
      %p95 = scmp.ne.s32.totalorder %s86, %s87
      %p96 = scmp.eq.s32.totalorder %s22, 0
      %p97 = por %p95, %p96
      %p98 = scmp.ne.s32.totalorder %s86, %s87
      %p99 = scmp.eq.s32.totalorder %s23, 3
      %p100 = por %p98, %p99
      %p102 = scmp.ne.s32.totalorder %s87, %s101
      %p103 = scmp.eq.s32.totalorder %s23, 0
      %p104 = por %p102, %p103
      %s106 = sadd.s32 %s105, 1
      %p109 = scmp.eq.s32.totalorder %s17, 3
      %p110 = scmp.ne.s32.totalorder %s105, %s107
      %p111 = scmp.eq.s32.totalorder %s17, 0
      %p112 = por %p110, %p111
      %p113 = scmp.ne.s32.totalorder %s105, %s107
      %p114 = scmp.eq.s32.totalorder %s22, 3
      %p115 = por %p113, %p114
      %p116 = scmp.ne.s32.totalorder %s107, %s108
      %p117 = scmp.eq.s32.totalorder %s22, 0
      %p118 = por %p116, %p117
      %p119 = scmp.ne.s32.totalorder %s107, %s108
      %p120 = scmp.eq.s32.totalorder %s23, 3
      %p121 = por %p119, %p120
      %p123 = scmp.ne.s32.totalorder %s108, %s122
      %p124 = scmp.eq.s32.totalorder %s23, 0
      %p125 = por %p123, %p124
      %s126 = ssub.s32 %s24, %s36
      %s127 = ssub.s32 %s25, %s32
      %s128 = sor.u32 %s126, %s127
      %p129 = scmp.eq.s32.totalorder %s128, 0
      %s131 = sadd.s32 %s130, 1
      %s132 = scalar_select %p129, %s130, %s131
      %p135 = pneg %p129
      %p136 = scmp.eq.s32.totalorder %s17, 3
      %p137 = por %p135, %p136
      %p138 = scmp.ne.s32.totalorder %s130, %s133
      %p139 = scmp.eq.s32.totalorder %s17, 0
      %p140 = por %p138, %p139
      %p141 = scmp.ne.s32.totalorder %s130, %s133
      %p142 = scmp.eq.s32.totalorder %s22, 3
      %p143 = por %p141, %p142
      %p144 = scmp.ne.s32.totalorder %s133, %s134
      %p145 = scmp.eq.s32.totalorder %s22, 0
      %p146 = por %p144, %p145
      %p147 = scmp.ne.s32.totalorder %s133, %s134
      %p148 = scmp.eq.s32.totalorder %s23, 3
      %p149 = por %p147, %p148
      %p151 = scmp.ne.s32.totalorder %s134, %s150
      %p152 = scmp.eq.s32.totalorder %s23, 0
      %p153 = por %p151, %p152
      %p154 = scmp.le.s32.totalorder 1, %s17
      %p155 = scmp.lt.s32.totalorder %s17, 5
      %p156 = pnand %p154, %p155
      %p157 = pneg %p156
      // Predicated region
      $region9: #{tpu_custom_call.1} parent=5 // pred_check
        _
      $region10: #{tpu_custom_call.1} parent=5 // pred_check_branch
        %159 = sbr.rel (%p156) target = $region12
      $region11: #{tpu_custom_call.1} parent=5 // pred_region
        %s160 = ssub.s32 %s17, 1
        // Predicated region
        $region13: #{tpu_custom_call.1} parent=11 // pred_check
          %p161 = pneg %p50
        $region14: #{tpu_custom_call.1} parent=11 // pred_check_branch
          %163 = sbr.rel (%p161) target = $region16
        $region15: #{tpu_custom_call.1} parent=11 // pred_region
          _
        $region16: #{tpu_custom_call.1} parent=11 // pred_fallthru
          _
        // Predicated region
        $region17: #{tpu_custom_call.1} parent=11 // pred_check
          %p164 = pneg %p97
        $region18: #{tpu_custom_call.1} parent=11 // pred_check_branch
          %166 = sbr.rel (%p164) target = $region20
        $region19: #{tpu_custom_call.1} parent=11 // pred_region
          _
        $region20: #{tpu_custom_call.1} parent=11 // pred_fallthru
          _
        // Predicated region
        $region21: #{tpu_custom_call.1} parent=11 // pred_check
          %p167 = pneg %p118
        $region22: #{tpu_custom_call.1} parent=11 // pred_check_branch
          %169 = sbr.rel (%p167) target = $region24
        $region23: #{tpu_custom_call.1} parent=11 // pred_region
          _
        $region24: #{tpu_custom_call.1} parent=11 // pred_fallthru
          _
      $region12: #{tpu_custom_call.1} parent=5 // pred_fallthru
        _
      %p170 = scmp.lt.s32.totalorder %s17, 4
      // Predicated region
      $region25: #{tpu_custom_call.1} parent=5 // pred_check
        %p171 = pneg %p170
      $region26: #{tpu_custom_call.1} parent=5 // pred_check_branch
        %173 = sbr.rel (%p171) target = $region28
      $region27: #{tpu_custom_call.1} parent=5 // pred_region
        // Predicated region
        $region29: #{tpu_custom_call.1} parent=27 // pred_check
          %p174 = pneg %p70
        $region30: #{tpu_custom_call.1} parent=27 // pred_check_branch
          %176 = sbr.rel (%p174) target = $region32
        $region31: #{tpu_custom_call.1} parent=27 // pred_region
          %s177 = sand.u32 %s60, 1
          %s178 = scalar_lea.sflag [#allocation4], %s177
          %s179 = sand.u32 %s60, 1
          %s180 = smul.addr %s179, 64
          %s181 = scalar_lea.vmem [#allocation3], %s180
          %183 = vsyncadd %s178, 0
          %s184 = smul.addr %s24, 8
          %s185 = smul.addr %s184, 8
          %s186 = scalar_lea.hbm %s1, %s185
          %s187 = sshll.u32 %s186, 4
          %s188 = int_to_ptr.hbm [resolvable:$true] %s187
          %s189 = sshll.u32 %s181, 4
          %s190 = int_to_ptr.vmem [resolvable:$true] %s189
          %195 = dma.hbm_to_vmem [thread:$0]  %s188, 1024, %s190, %s178, 256, 256, 16
        $region32: #{tpu_custom_call.1} parent=27 // pred_fallthru
          _
      $region28: #{tpu_custom_call.1} parent=5 // pred_fallthru
        _
      %p196 = scmp.le.s32.totalorder 1, %s17
      %p197 = scmp.lt.s32.totalorder %s17, 5
      %p198 = pnand %p196, %p197
      %p199 = pneg %p198
      // Predicated region
      $region33: #{tpu_custom_call.1} parent=5 // pred_check
        _
      $region34: #{tpu_custom_call.1} parent=5 // pred_check_branch
        %201 = sbr.rel (%p198) target = $region36
      $region35: #{tpu_custom_call.1} parent=5 // pred_region
        %s202 = ssub.s32 %s17, 1
        %s203 = sand.u32 %s63, 1
        %s204 = scalar_lea.sflag [#allocation4], %s203
        %s205 = sand.u32 %s63, 1
        %s206 = smul.addr %s205, 64
        %s207 = scalar_lea.vmem [#allocation3], %s206
        // Predicated region
        $region37: #{tpu_custom_call.1} parent=35 // pred_check
          %p208 = pneg %p76
        $region38: #{tpu_custom_call.1} parent=35 // pred_check_branch
          %210 = sbr.rel (%p208) target = $region40
        $region39: #{tpu_custom_call.1} parent=35 // pred_region
          %212 = dma.done %s204, 1024
        $region40: #{tpu_custom_call.1} parent=35 // pred_fallthru
          _
        %p213 = pneg %p50
        %p214 = pneg %p47
        %s215 = sand.u32 %s63, 1
        %s216 = scalar_lea.sflag [#allocation4], %s215
        %s217 = sand.u32 %s63, 1
        %s218 = smul.addr %s217, 64
        %s219 = scalar_lea.vmem [#allocation3], %s218
        %p220 = pneg %p76
        %p221 = pneg %p73
        %p222 = pneg %p97
        %p223 = pneg %p94
        %p224 = pneg %p118
        %p225 = pneg %p115
        %p226 = pneg %p146
        %p227 = pneg %p143
        %s228 = sand.u32 %s133, 1
        %s229 = scalar_lea.sflag [#allocation5], %s228
        %s230 = sand.u32 %s133, 1
        %s231 = smul.addr %s230, 32
        %s232 = scalar_lea.vmem [#allocation6], %s231
        %s234 = smul.u32 %s27, 128
        %v235 = vld [vmem:[%s207] sm:$0xff]
        %v236 = vld [vmem:[%s207 + $0x8] sm:$0xff]
        %v237 = vld [vmem:[%s207 + $0x10] sm:$0xff]
        %v238 = vld [vmem:[%s207 + $0x18] sm:$0xff]
        %v239 = vld [vmem:[%s207 + $0x20] sm:$0xff]
        %v240 = vld [vmem:[%s207 + $0x28] sm:$0xff]
        %v241 = vld [vmem:[%s207 + $0x30] sm:$0xff]
        %v242 = vld [vmem:[%s207 + $0x38] sm:$0xff]
        %v243 = vpack.c.bf16 %v237, %v235
        %v244 = vpack.c.bf16 %v238, %v236
        %v245 = vpack.c.bf16 %v241, %v239
        %v246 = vpack.c.bf16 %v242, %v240
        %v247 = vld [vmem:[%s2 + $0x4] sm:$0xf]
        %v248 = vld [vmem:[%s2 + $0x8] sm:$0xf]
        %v249 = vld [vmem:[%s2 + $0xc] sm:$0xf]
        %v250 = vld [vmem:[%s2 + $0x10] sm:$0xf]
        %v251 = vld [vmem:[%s2 + $0x14] sm:$0xf]
        %v252 = vld [vmem:[%s3 + $0x8] sm:$0xff]
        %v253 = vld [vmem:[%s3 + $0x10] sm:$0xff]
        %v254 = vld [vmem:[%s3 + $0x18] sm:$0xff]
        %v255 = vld [vmem:[%s3 + $0x20] sm:$0xff]
        %v256 = vld [vmem:[%s3 + $0x28] sm:$0xff]
        %258 = vset.pattern.permute.xlu0 0
        %259 = vperm.xlu0 %258, %v252
        %v260 = vpop.permute.xlu0 %259
        %263 = vset.pattern.permute.xlu0 0
        %264 = vperm.xlu0 %263, %v253
        %v265 = vpop.permute.xlu0 %264
        %268 = vset.pattern.permute.xlu0 0
        %269 = vperm.xlu0 %268, %v254
        %v270 = vpop.permute.xlu0 %269
        %273 = vset.pattern.permute.xlu0 0
        %274 = vperm.xlu0 %273, %v255
        %v275 = vpop.permute.xlu0 %274
        %278 = vset.pattern.permute.xlu0 0
        %279 = vperm.xlu0 %278, %v256
        %v280 = vpop.permute.xlu0 %279
        %v287 = vunpack.c.l.b16 %v247
        %v288 = vunpack.c.l.b16 %v248
        %v289 = vunpack.c.l.b16 %v249
        %v290 = vunpack.c.l.b16 %v250
        %v291 = vunpack.c.l.b16 %v251
        %v292 = vpack.c.b16 %v288, %v287
        %v293 = vpack.c.b16 %v290, %v289
        %v294 = vpack.c.b16 %v291, %v291
        %vm295 = vcmask 261120
        %v297 = vsel %vm295, %v292, 0
        %v300 = vsel %vm295, %v293, 0
        %v303 = vsel %vm295, %v294, 0
        %305 = vmatpush.bf16.msra.mxu0 0
        %306 = vmatpush.bf16.msra.mxu0 0
        %307 = vmatpush.bf16.msra.mxu0 0
        %308 = vmatpush.bf16.msra.mxu0 0
        %309 = vmatpush.bf16.msra.mxu0 0
        %310 = vmatpush.bf16.msra.mxu0 0
        %311 = vmatpush.bf16.msra.mxu0 %v245
        %312 = vmatpush.bf16.msra.mxu0 %v243
        %313 = vmatmul.bf16.gmra.mxu0 %v297
        %v314 = vpop.f32.mrf.mxu0
        %v315 = vadd.f32 %v260, %v314
        %v316 = vpop.f32.mrf.mxu0
        %v317 = vadd.f32 %v265, %v316
        %318 = vmatmul.bf16.gmra.mxu0 %v300
        %v319 = vpop.f32.mrf.mxu0
        %v320 = vadd.f32 %v270, %v319
        %v321 = vpop.f32.mrf.mxu0
        %v322 = vadd.f32 %v275, %v321
        %323 = vmatmul.bf16.gmra.mxu0 %v303
        %v324 = vpop.f32.mrf.mxu0
        %v325 = vadd.f32 %v280, %v324
        %v326 = vpop.f32.mrf.mxu0
        %327 = vdwg.mxu0
        %328 = vmatpush.bf16.msra.mxu0 0
        %329 = vmatpush.bf16.msra.mxu0 0
        %330 = vmatpush.bf16.msra.mxu0 0
        %331 = vmatpush.bf16.msra.mxu0 0
        %332 = vmatpush.bf16.msra.mxu0 0
        %333 = vmatpush.bf16.msra.mxu0 0
        %334 = vmatpush.bf16.msra.mxu0 %v246
        %335 = vmatpush.bf16.msra.mxu0 %v244
        %336 = vmatmul.bf16.gmra.mxu0 %v297
        %v337 = vpop.f32.mrf.mxu0
        %v338 = vadd.f32 %v260, %v337
        %v339 = vpop.f32.mrf.mxu0
        %v340 = vadd.f32 %v265, %v339
        %341 = vmatmul.bf16.gmra.mxu0 %v300
        %v342 = vpop.f32.mrf.mxu0
        %v343 = vadd.f32 %v270, %v342
        %v344 = vpop.f32.mrf.mxu0
        %v345 = vadd.f32 %v275, %v344
        %346 = vmatmul.bf16.gmra.mxu0 %v303
        %v347 = vpop.f32.mrf.mxu0
        %v348 = vadd.f32 %v280, %v347
        %v349 = vpop.f32.mrf.mxu0
        %350 = vdwg.mxu0
        %v351 = vpack.c.bf16 %v315, %v315
        %v352 = vpack.c.bf16 %v338, %v338
        %v353 = vpack.c.bf16 %v320, %v317
        %v354 = vpack.c.bf16 %v343, %v340
        %v355 = vpack.c.bf16 %v325, %v322
        %v356 = vpack.c.bf16 %v348, %v345
        %s357 = sshra.s32 %s234, 7
        %s358 = sand.u32 %s234, 127
        %s359 = smul.addr %s357, 8
        %s360 = scalar_lea.vmem %s207, %s359 [#allocation3]
        %v361 = vld [vmem:[%s360] sm:$0xff]
        %v362 = vld [vmem:[%s360 + $0x10] sm:$0xff]
        %v363 = vld [vmem:[%s360 + $0x20] sm:$0xff]
        %v364 = vld [vmem:[%s360 + $0x30] sm:$0xff]
        %v365 = vld [vmem:[%s2] sm:$0xf]
        %v366 = vpack.c.bf16 %v362, %v361
        %v367 = vpack.c.bf16 %v364, %v363
        %v368 = vld [vmem:[%s3] sm:$0xff]
        %370 = vset.pattern.permute.xlu0 0
        %371 = vperm.xlu0 %370, %v368
        %v372 = vpop.permute.xlu0 %371
        %v375 = vsel %vm295, %v365, 0
        %377 = vmatpush.bf16.msra.mxu0 0
        %378 = vmatpush.bf16.msra.mxu0 0
        %379 = vmatpush.bf16.msra.mxu0 0
        %380 = vmatpush.bf16.msra.mxu0 0
        %381 = vmatpush.bf16.msra.mxu0 0
        %382 = vmatpush.bf16.msra.mxu0 0
        %383 = vmatpush.bf16.msra.mxu0 %v367
        %384 = vmatpush.bf16.msra.mxu0 %v366
        %385 = vmatmul.bf16.gmra.mxu0 %v375
        %v386 = vpop.f32.mrf.mxu0
        %v387 = vadd.f32 %v372, %v386
        %v388 = vpop.f32.mrf.mxu0
        %389 = vdwg.mxu0
        %v390 = vpack.c.bf16 %v387, %v387
        %391 = vxpose.binary.xlu0.c.b16.start [1/16] %v352, %v351, 128
        %392 = vxpose.binary.xlu0.c.b16.cont [2/16] 0, 0, 128
        %393 = vxpose.binary.xlu0.c.b16.cont [3/16] 0, 0, 128
        %394 = vxpose.binary.xlu0.c.b16.cont [4/16] 0, 0, 128
        %395 = vxpose.binary.xlu0.c.b16.cont [5/16] 0, 0, 128
        %396 = vxpose.binary.xlu0.c.b16.cont [6/16] 0, 0, 128
        %397 = vxpose.binary.xlu0.c.b16.cont [7/16] 0, 0, 128
        %398 = vxpose.binary.xlu0.c.b16.end [8/16] 0, 0, 128
        %v399 = vpop.trf.xlu0
        %v400 = vpop.trf.xlu0
        %v401 = vpop.trf.xlu0
        %v402 = vpop.trf.xlu0
        %v403 = vpop.trf.xlu0
        %v404 = vpop.trf.xlu0
        %v405 = vpop.trf.xlu0
        %v406 = vpop.trf.xlu0
        %v407 = vpop.trf.xlu0
        %v408 = vpop.trf.xlu0
        %v409 = vpop.trf.xlu0
        %v410 = vpop.trf.xlu0
        %v411 = vpop.trf.xlu0
        %v412 = vpop.trf.xlu0
        %v413 = vpop.trf.xlu0
        %v414 = vpop.trf.xlu0
        %vm415 = vcmask 64512
        %v417 = vsel %vm415, %v399, 0
        %v420 = vsel %vm415, %v401, 0
        %v423 = vsel %vm415, %v403, 0
        %v426 = vsel %vm415, %v405, 0
        %v429 = vsel %vm415, %v407, 0
        %v432 = vsel %vm415, %v409, 0
        %v435 = vsel %vm415, %v411, 0
        %v438 = vsel %vm415, %v413, 0
        %v441 = vsel %vm415, %v400, 0
        %v444 = vsel %vm415, %v402, 0
        %v447 = vsel %vm415, %v404, 0
        %v450 = vsel %vm415, %v406, 0
        %v453 = vsel %vm415, %v408, 0
        %v456 = vsel %vm415, %v410, 0
        %v459 = vsel %vm415, %v412, 0
        %v462 = vsel %vm415, %v414, 0
        %vm464 = vcmask 1043456
        %v466 = vsel %vm464, %v390, 0
        %468 = vmatpush.bf16.msra.mxu0 0
        %469 = vmatpush.bf16.msra.mxu0 0
        %470 = vmatpush.bf16.msra.mxu0 0
        %471 = vmatpush.bf16.msra.mxu0 0
        %472 = vmatpush.bf16.msra.mxu0 0
        %473 = vmatpush.bf16.msra.mxu0 0
        %474 = vmatpush.bf16.msra.mxu0 0
        %475 = vmatpush.bf16.msra.mxu0 %v466
        %476 = vmatmul.bf16.gmra.mxu0 %v417
        %v477 = vpop.f32.mrf.mxu0
        %v478 = vadd.f32 0.0, %v477
        %v479 = vpop.f32.mrf.mxu0
        %v480 = vadd.f32 0.0, %v479
        %481 = vmatmul.bf16.gmra.mxu0 %v420
        %v482 = vpop.f32.mrf.mxu0
        %v483 = vadd.f32 0.0, %v482
        %v484 = vpop.f32.mrf.mxu0
        %v485 = vadd.f32 0.0, %v484
        %486 = vmatmul.bf16.gmra.mxu0 %v423
        %v487 = vpop.f32.mrf.mxu0
        %v488 = vadd.f32 0.0, %v487
        %v489 = vpop.f32.mrf.mxu0
        %v490 = vadd.f32 0.0, %v489
        %491 = vmatmul.bf16.gmra.mxu0 %v426
        %v492 = vpop.f32.mrf.mxu0
        %v493 = vadd.f32 0.0, %v492
        %v494 = vpop.f32.mrf.mxu0
        %v495 = vadd.f32 0.0, %v494
        %496 = vmatmul.bf16.gmra.mxu0 %v429
        %v497 = vpop.f32.mrf.mxu0
        %v498 = vadd.f32 0.0, %v497
        %v499 = vpop.f32.mrf.mxu0
        %v500 = vadd.f32 0.0, %v499
        %501 = vmatmul.bf16.gmra.mxu0 %v432
        %v502 = vpop.f32.mrf.mxu0
        %v503 = vadd.f32 0.0, %v502
        %v504 = vpop.f32.mrf.mxu0
        %v505 = vadd.f32 0.0, %v504
        %506 = vmatmul.bf16.gmra.mxu0 %v435
        %v507 = vpop.f32.mrf.mxu0
        %v508 = vadd.f32 0.0, %v507
        %v509 = vpop.f32.mrf.mxu0
        %v510 = vadd.f32 0.0, %v509
        %511 = vmatmul.bf16.gmra.mxu0 %v438
        %v512 = vpop.f32.mrf.mxu0
        %v513 = vadd.f32 0.0, %v512
        %v514 = vpop.f32.mrf.mxu0
        %v515 = vadd.f32 0.0, %v514
        %516 = vmatmul.bf16.gmra.mxu0 %v441
        %v517 = vpop.f32.mrf.mxu0
        %v518 = vadd.f32 0.0, %v517
        %v519 = vpop.f32.mrf.mxu0
        %v520 = vadd.f32 0.0, %v519
        %521 = vmatmul.bf16.gmra.mxu0 %v444
        %v522 = vpop.f32.mrf.mxu0
        %v523 = vadd.f32 0.0, %v522
        %v524 = vpop.f32.mrf.mxu0
        %v525 = vadd.f32 0.0, %v524
        %526 = vmatmul.bf16.gmra.mxu0 %v447
        %v527 = vpop.f32.mrf.mxu0
        %v528 = vadd.f32 0.0, %v527
        %v529 = vpop.f32.mrf.mxu0
        %v530 = vadd.f32 0.0, %v529
        %531 = vmatmul.bf16.gmra.mxu0 %v450
        %v532 = vpop.f32.mrf.mxu0
        %v533 = vadd.f32 0.0, %v532
        %v534 = vpop.f32.mrf.mxu0
        %v535 = vadd.f32 0.0, %v534
        %536 = vmatmul.bf16.gmra.mxu0 %v453
        %v537 = vpop.f32.mrf.mxu0
        %v538 = vadd.f32 0.0, %v537
        %v539 = vpop.f32.mrf.mxu0
        %v540 = vadd.f32 0.0, %v539
        %541 = vmatmul.bf16.gmra.mxu0 %v456
        %v542 = vpop.f32.mrf.mxu0
        %v543 = vadd.f32 0.0, %v542
        %v544 = vpop.f32.mrf.mxu0
        %v545 = vadd.f32 0.0, %v544
        %546 = vmatmul.bf16.gmra.mxu0 %v459
        %v547 = vpop.f32.mrf.mxu0
        %v548 = vadd.f32 0.0, %v547
        %v549 = vpop.f32.mrf.mxu0
        %v550 = vadd.f32 0.0, %v549
        %551 = vmatmul.bf16.gmra.mxu0 %v462
        %v552 = vpop.f32.mrf.mxu0
        %v553 = vadd.f32 0.0, %v552
        %v554 = vpop.f32.mrf.mxu0
        %v555 = vadd.f32 0.0, %v554
        %556 = vdwg.mxu0
        %v557 = vmax.f32 %v478, %v488
        %v558 = vmax.f32 %v480, %v490
        %v559 = vmax.f32 %v483, %v493
        %v560 = vmax.f32 %v485, %v495
        %v561 = vmax.f32 %v557, %v498
        %v562 = vmax.f32 %v558, %v500
        %v563 = vmax.f32 %v559, %v503
        %v564 = vmax.f32 %v560, %v505
        %v565 = vmax.f32 %v561, %v508
        %v566 = vmax.f32 %v562, %v510
        %v567 = vmax.f32 %v563, %v513
        %v568 = vmax.f32 %v564, %v515
        %v569 = vmax.f32 %v565, %v518
        %v570 = vmax.f32 %v566, %v520
        %v571 = vmax.f32 %v567, %v523
        %v572 = vmax.f32 %v568, %v525
        %v573 = vmax.f32 %v569, %v528
        %v574 = vmax.f32 %v570, %v530
        %v575 = vmax.f32 %v571, %v533
        %v576 = vmax.f32 %v572, %v535
        %v577 = vmax.f32 %v573, %v538
        %v578 = vmax.f32 %v574, %v540
        %v579 = vmax.f32 %v575, %v543
        %v580 = vmax.f32 %v576, %v545
        %v581 = vmax.f32 %v577, %v548
        %v582 = vmax.f32 %v578, %v550
        %v583 = vmax.f32 %v579, %v553
        %v584 = vmax.f32 %v580, %v555
        %v585 = vmax.f32 %v581, %v582
        %v586 = vmax.f32 %v583, %v584
        %v587 = vmax.f32 %v585, %v586
        %v588 = vrot.slane %v587, 4
        %v589 = vmax.f32 %v587, %v588
        %v590 = vrot.slane %v589, 2
        %v591 = vmax.f32 %v589, %v590
        %v592 = vrot.slane %v591, 1
        %v593 = vmax.f32 %v591, %v592
        %v594 = vsub.f32 %v478, %v593
        %v595 = vsub.f32 %v480, %v593
        %v596 = vsub.f32 %v483, %v593
        %v597 = vsub.f32 %v485, %v593
        %v598 = vsub.f32 %v488, %v593
        %v599 = vsub.f32 %v490, %v593
        %v600 = vsub.f32 %v493, %v593
        %v601 = vsub.f32 %v495, %v593
        %v602 = vsub.f32 %v498, %v593
        %v603 = vsub.f32 %v500, %v593
        %v604 = vsub.f32 %v503, %v593
        %v605 = vsub.f32 %v505, %v593
        %v606 = vsub.f32 %v508, %v593
        %v607 = vsub.f32 %v510, %v593
        %v608 = vsub.f32 %v513, %v593
        %v609 = vsub.f32 %v515, %v593
        %v610 = vsub.f32 %v518, %v593
        %v611 = vsub.f32 %v520, %v593
        %v612 = vsub.f32 %v523, %v593
        %v613 = vsub.f32 %v525, %v593
        %v614 = vsub.f32 %v528, %v593
        %v615 = vsub.f32 %v530, %v593
        %v616 = vsub.f32 %v533, %v593
        %v617 = vsub.f32 %v535, %v593
        %v618 = vsub.f32 %v538, %v593
        %v619 = vsub.f32 %v540, %v593
        %v620 = vsub.f32 %v543, %v593
        %v621 = vsub.f32 %v545, %v593
        %v622 = vsub.f32 %v548, %v593
        %v623 = vsub.f32 %v550, %v593
        %v624 = vsub.f32 %v553, %v593
        %v625 = vsub.f32 %v555, %v593
        %v626 = vmul.f32 %v594, 1.442695
        %v627 = vpow.pop %v626
        %v628 = vmul.f32 %v595, 1.442695
        %v629 = vpow.pop %v628
        %v630 = vmul.f32 %v596, 1.442695
        %v631 = vpow.pop %v630
        %v632 = vmul.f32 %v597, 1.442695
        %v633 = vpow.pop %v632
        %v634 = vmul.f32 %v598, 1.442695
        %v635 = vpow.pop %v634
        %v636 = vmul.f32 %v599, 1.442695
        %v637 = vpow.pop %v636
        %v638 = vmul.f32 %v600, 1.442695
        %v639 = vpow.pop %v638
        %v640 = vmul.f32 %v601, 1.442695
        %v641 = vpow.pop %v640
        %v642 = vmul.f32 %v602, 1.442695
        %v643 = vpow.pop %v642
        %v644 = vmul.f32 %v603, 1.442695
        %v645 = vpow.pop %v644
        %v646 = vmul.f32 %v604, 1.442695
        %v647 = vpow.pop %v646
        %v648 = vmul.f32 %v605, 1.442695
        %v649 = vpow.pop %v648
        %v650 = vmul.f32 %v606, 1.442695
        %v651 = vpow.pop %v650
        %v652 = vmul.f32 %v607, 1.442695
        %v653 = vpow.pop %v652
        %v654 = vmul.f32 %v608, 1.442695
        %v655 = vpow.pop %v654
        %v656 = vmul.f32 %v609, 1.442695
        %v657 = vpow.pop %v656
        %v658 = vmul.f32 %v610, 1.442695
        %v659 = vpow.pop %v658
        %v660 = vmul.f32 %v611, 1.442695
        %v661 = vpow.pop %v660
        %v662 = vmul.f32 %v612, 1.442695
        %v663 = vpow.pop %v662
        %v664 = vmul.f32 %v613, 1.442695
        %v665 = vpow.pop %v664
        %v666 = vmul.f32 %v614, 1.442695
        %v667 = vpow.pop %v666
        %v668 = vmul.f32 %v615, 1.442695
        %v669 = vpow.pop %v668
        %v670 = vmul.f32 %v616, 1.442695
        %v671 = vpow.pop %v670
        %v672 = vmul.f32 %v617, 1.442695
        %v673 = vpow.pop %v672
        %v674 = vmul.f32 %v618, 1.442695
        %v675 = vpow.pop %v674
        %v676 = vmul.f32 %v619, 1.442695
        %v677 = vpow.pop %v676
        %v678 = vmul.f32 %v620, 1.442695
        %v679 = vpow.pop %v678
        %v680 = vmul.f32 %v621, 1.442695
        %v681 = vpow.pop %v680
        %v682 = vmul.f32 %v622, 1.442695
        %v683 = vpow.pop %v682
        %v684 = vmul.f32 %v623, 1.442695
        %v685 = vpow.pop %v684
        %v686 = vmul.f32 %v624, 1.442695
        %v687 = vpow.pop %v686
        %v688 = vmul.f32 %v625, 1.442695
        %v689 = vpow.pop %v688
        %v690 = vadd.f32 %v627, %v629
        %v691 = vadd.f32 %v690, %v631
        %v692 = vadd.f32 %v691, %v633
        %v693 = vadd.f32 %v692, %v635
        %v694 = vadd.f32 %v693, %v637
        %v695 = vadd.f32 %v694, %v639
        %v696 = vadd.f32 %v695, %v641
        %v697 = vadd.f32 %v696, %v643
        %v698 = vadd.f32 %v697, %v645
        %v699 = vadd.f32 %v698, %v647
        %v700 = vadd.f32 %v699, %v649
        %v701 = vadd.f32 %v700, %v651
        %v702 = vadd.f32 %v701, %v653
        %v703 = vadd.f32 %v702, %v655
        %v704 = vadd.f32 %v703, %v657
        %v705 = vadd.f32 %v704, %v659
        %v706 = vadd.f32 %v705, %v661
        %v707 = vadd.f32 %v706, %v663
        %v708 = vadd.f32 %v707, %v665
        %v709 = vadd.f32 %v708, %v667
        %v710 = vadd.f32 %v709, %v669
        %v711 = vadd.f32 %v710, %v671
        %v712 = vadd.f32 %v711, %v673
        %v713 = vadd.f32 %v712, %v675
        %v714 = vadd.f32 %v713, %v677
        %v715 = vadd.f32 %v714, %v679
        %v716 = vadd.f32 %v715, %v681
        %v717 = vadd.f32 %v716, %v683
        %v718 = vadd.f32 %v717, %v685
        %v719 = vadd.f32 %v718, %v687
        %v720 = vadd.f32 %v719, %v689
        %v721 = vrot.slane %v720, 4
        %v722 = vadd.f32 %v720, %v721
        %v723 = vrot.slane %v722, 2
        %v724 = vadd.f32 %v722, %v723
        %v725 = vrot.slane %v724, 1
        %v726 = vadd.f32 %v724, %v725
        %v727 = vrcp.pop %v726
        %v728 = vmul.f32 %v627, %v727
        %v729 = vmul.f32 %v629, %v727
        %v730 = vmul.f32 %v631, %v727
        %v731 = vmul.f32 %v633, %v727
        %v732 = vmul.f32 %v635, %v727
        %v733 = vmul.f32 %v637, %v727
        %v734 = vmul.f32 %v639, %v727
        %v735 = vmul.f32 %v641, %v727
        %v736 = vmul.f32 %v643, %v727
        %v737 = vmul.f32 %v645, %v727
        %v738 = vmul.f32 %v647, %v727
        %v739 = vmul.f32 %v649, %v727
        %v740 = vmul.f32 %v651, %v727
        %v741 = vmul.f32 %v653, %v727
        %v742 = vmul.f32 %v655, %v727
        %v743 = vmul.f32 %v657, %v727
        %v744 = vmul.f32 %v659, %v727
        %v745 = vmul.f32 %v661, %v727
        %v746 = vmul.f32 %v663, %v727
        %v747 = vmul.f32 %v665, %v727
        %v748 = vmul.f32 %v667, %v727
        %v749 = vmul.f32 %v669, %v727
        %v750 = vmul.f32 %v671, %v727
        %v751 = vmul.f32 %v673, %v727
        %v752 = vmul.f32 %v675, %v727
        %v753 = vmul.f32 %v677, %v727
        %v754 = vmul.f32 %v679, %v727
        %v755 = vmul.f32 %v681, %v727
        %v756 = vmul.f32 %v683, %v727
        %v757 = vmul.f32 %v685, %v727
        %v758 = vmul.f32 %v687, %v727
        %v759 = vmul.f32 %v689, %v727
        %v760 = vpack.c.bf16 %v729, %v728
        %v761 = vpack.c.bf16 %v731, %v730
        %v762 = vpack.c.bf16 %v733, %v732
        %v763 = vpack.c.bf16 %v735, %v734
        %v764 = vpack.c.bf16 %v737, %v736
        %v765 = vpack.c.bf16 %v739, %v738
        %v766 = vpack.c.bf16 %v741, %v740
        %v767 = vpack.c.bf16 %v743, %v742
        %v768 = vpack.c.bf16 %v745, %v744
        %v769 = vpack.c.bf16 %v747, %v746
        %v770 = vpack.c.bf16 %v749, %v748
        %v771 = vpack.c.bf16 %v751, %v750
        %v772 = vpack.c.bf16 %v753, %v752
        %v773 = vpack.c.bf16 %v755, %v754
        %v774 = vpack.c.bf16 %v757, %v756
        %v775 = vpack.c.bf16 %v759, %v758
        %776 = vmatpush.bf16.msra.mxu0 %v767
        %777 = vmatpush.bf16.msra.mxu0 %v766
        %778 = vmatpush.bf16.msra.mxu0 %v765
        %779 = vmatpush.bf16.msra.mxu0 %v764
        %780 = vmatpush.bf16.msra.mxu0 %v763
        %781 = vmatpush.bf16.msra.mxu0 %v762
        %782 = vmatpush.bf16.msra.mxu0 %v761
        %783 = vmatpush.bf16.msra.mxu0 %v760
        %784 = vmatmul.bf16.gmra.mxu0 %v353
        %v785 = vpop.f32.mrf.mxu0
        %v786 = vadd.f32 0.0, %v785
        %v787 = vpop.f32.mrf.mxu0
        %v788 = vadd.f32 0.0, %v787
        %789 = vmatmul.bf16.gmra.mxu0 %v355
        %v790 = vpop.f32.mrf.mxu0
        %v791 = vadd.f32 0.0, %v790
        %v792 = vpop.f32.mrf.mxu0
        %v793 = vadd.f32 0.0, %v792
        %794 = vdwg.mxu0
        %795 = vmatpush.bf16.msra.mxu0 %v775
        %796 = vmatpush.bf16.msra.mxu0 %v774
        %797 = vmatpush.bf16.msra.mxu0 %v773
        %798 = vmatpush.bf16.msra.mxu0 %v772
        %799 = vmatpush.bf16.msra.mxu0 %v771
        %800 = vmatpush.bf16.msra.mxu0 %v770
        %801 = vmatpush.bf16.msra.mxu0 %v769
        %802 = vmatpush.bf16.msra.mxu0 %v768
        %803 = vmatmul.bf16.gmra.mxu0 %v354
        %v804 = vpop.f32.mrf.mxu0
        %v805 = vadd.f32 %v786, %v804
        %v806 = vpop.f32.mrf.mxu0
        %v807 = vadd.f32 %v788, %v806
        %808 = vmatmul.bf16.gmra.mxu0 %v356
        %v809 = vpop.f32.mrf.mxu0
        %v810 = vadd.f32 %v791, %v809
        %v811 = vpop.f32.mrf.mxu0
        %v812 = vadd.f32 %v793, %v811
        %813 = vdwg.mxu0
        %s814 = sld [smem:[#allocation2]]
        %v815 = vstv %s814
        %v816 = vmul.f32 %v815, %v805
        %v817 = vmul.f32 %v815, %v807
        %v818 = vmul.f32 %v815, %v810
        %v819 = vmul.f32 %v815, %v812
        %v820 = vadd.f32 %v816, %v361
        %v821 = vadd.f32 %v817, %v362
        %v822 = vadd.f32 %v818, %v363
        %v823 = vadd.f32 %v819, %v364
        %824 = vst [vmem:[%s232] sm:$0xff] %v820
        %825 = vst [vmem:[%s232 + $0x8] sm:$0xff] %v821
        %826 = vst [vmem:[%s232 + $0x10] sm:$0xff] %v822
        %827 = vst [vmem:[%s232 + $0x18] sm:$0xff] %v823
        %s828 = sand.u32 %s133, 1
        %s829 = scalar_lea.sflag [#allocation5], %s828
        %s830 = sand.u32 %s133, 1
        %s831 = smul.addr %s830, 32
        %s832 = scalar_lea.vmem [#allocation6], %s831
        // Predicated region
        $region41: #{tpu_custom_call.1} parent=35 // pred_check
          %p833 = pneg %p143
        $region42: #{tpu_custom_call.1} parent=35 // pred_check_branch
          %835 = sbr.rel (%p833) target = $region44
        $region43: #{tpu_custom_call.1} parent=35 // pred_region
          %837 = vsyncadd %s829, 0
          %s838 = smul.addr %s26, 8
          %s839 = sadd.s32 %s27, %s838
          %s840 = smul.addr %s839, 8
          %s841 = scalar_lea.hbm %s4, %s840
          %s842 = sshll.u32 %s832, 4
          %s843 = int_to_ptr.vmem [resolvable:$true] %s842
          %s844 = sshll.u32 %s841, 4
          %s845 = int_to_ptr.hbm [resolvable:$true] %s844
          %850 = dma.vmem_to_hbm [thread:$0]  %s843, 512, %s845, %s829, 128, 256, 8
        $region44: #{tpu_custom_call.1} parent=35 // pred_fallthru
          _
      $region36: #{tpu_custom_call.1} parent=5 // pred_fallthru
        _
      %p851 = scmp.le.s32.totalorder 2, %s17
      // Predicated region
      $region45: #{tpu_custom_call.1} parent=5 // pred_check
        %p852 = pneg %p851
      $region46: #{tpu_custom_call.1} parent=5 // pred_check_branch
        %854 = sbr.rel (%p852) target = $region48
      $region47: #{tpu_custom_call.1} parent=5 // pred_region
        %s855 = ssub.s32 %s17, 2
        // Predicated region
        $region49: #{tpu_custom_call.1} parent=47 // pred_check
          %p856 = pneg %p149
        $region50: #{tpu_custom_call.1} parent=47 // pred_check_branch
          %858 = sbr.rel (%p856) target = $region52
        $region51: #{tpu_custom_call.1} parent=47 // pred_region
          %s859 = sand.u32 %s134, 1
          %s860 = scalar_lea.sflag [#allocation5], %s859
          %s861 = sand.u32 %s134, 1
          %s862 = smul.addr %s861, 32
          %s863 = scalar_lea.vmem [#allocation6], %s862
          %865 = dma.done %s860, 512
        $region52: #{tpu_custom_call.1} parent=47 // pred_fallthru
          _
      $region48: #{tpu_custom_call.1} parent=5 // pred_fallthru
        _
    $region6: #{tpu_custom_call.1} parent=1 // loop_footer
      %s21 = sadd.s32 1, %s17
    $region7: #{tpu_custom_call.1} parent=1 // loop_footer_branch
      %16 = sbr.rel target = $region3
    $region8: #{tpu_custom_call.1} parent=1 // loop_exit
      _
    %866 = vsyncpa [#allocation4], 1
    %s867 = scalar_lea.sflag [#allocation4], 1
    %868 = vsyncpa %s867, 1
    %869 = vsyncpa [#allocation5], 1
    %s870 = scalar_lea.sflag [#allocation5], 1
    %871 = vsyncpa %s870, 1

</llo_original>
